<compile_context>
chip_gen: v5e
topology: v5e:2x2
jax: 0.10.0
libtpu: 0.0.40
codegen_flags: <defaults>
</compile_context>

<pallas_src>
import jax
import jax.numpy as jnp
from jax.experimental import pallas as pl
from jax.experimental.pallas import tpu as pltpu


def _modrelu(x, bias):
    """modReLU: relu(|x| + b) * x / |x|, guarded at |x| == 0.

    The divide goes through the (otherwise idle) EUP as an approximate
    reciprocal; the jnp.where guard avoids the NaN the raw formula produces at
    exactly-zero activations.
    """
    ax = jnp.abs(x)
    scale = jnp.maximum(ax + bias, 0.0) * pl.reciprocal(ax, approx=True)
    return jnp.where(ax > 0.0, scale * x, 0.0)


def _make_vnet_kernel(num_layers, c):
    def kernel(*refs):
        bias_ref = refs[0]                           # SMEM (1,) learnable modReLU bias
        vhf_ref, s_ref, u_ref, vh_ref = refs[1:5]    # (C*C,TB), (C,TB), (C,C,TB), (C,C,TB)
        w_refs = refs[5:5 + num_layers]              # (out_i, in_i) weights (VMEM-resident)
        y_ref = refs[5 + num_layers]                 # (C, C, TB) output block

        b = bias_ref[0]

        # ---- MLP over flattened Vh (feature-major: h is (features, batch)) ----
        h = vhf_ref[...]                             # (C*C, TB)
        for li in range(num_layers):
            # (out, in) @ (in, TB) -> (out, TB)  ==  transposed PyTorch h @ W.T
            h = jnp.dot(w_refs[li][...], h, preferred_element_type=jnp.float32)
            if li < num_layers - 1:                  # modReLU between linears only
                h = _modrelu(h, b)

        confidence = jax.nn.sigmoid(jnp.abs(h))      # (C, TB)
        s_out = confidence * s_ref[...]              # (C, TB)

        # ---- y = U @ diag(S_out) @ Vh as C unrolled rank-1 VPU updates (no MXU) ----
        # us[i, j, b] = U[b, i, j] * s_out[b, j] ; vh[j, k, b] = Vh[b, j, k]
        us = u_ref[...] * s_out[None, :, :]          # (C, C, TB)
        vh = vh_ref[...]                             # (C, C, TB)
        acc = us[:, 0:1, :] * vh[0:1, :, :]          # (C, C, TB)
        for j in range(1, c):
            acc = acc + us[:, j:j + 1, :] * vh[j:j + 1, :, :]
        y_ref[...] = acc.astype(y_ref.dtype)         # lane-dense store (TB lanes)

    return kernel


def vnet_forward(x, K, th, weights, relubias):
    """VNet.forward(x, K, th).  K and th are unused by the reference forward.

    weights[i] has PyTorch nn.Linear layout (out_features, in_features), bias=False.
    """
    # TODO(synk): torch.linalg.svd has no Pallas equivalent; computed with jnp.linalg.svd outside the kernel.
    U, S, Vh = jnp.linalg.svd(x, full_matrices=False)
    B, C, _ = x.shape

    # Feature-major / batch-in-lanes layout (pure layout plumbing in the wrapper).
    vhf_t = jnp.transpose(Vh.reshape(B, C * C))      # (C*C, B); column b == Vh[b].view(-1)
    s_t = jnp.transpose(S)                           # (C, B)
    u_perm = jnp.transpose(U, (1, 2, 0))             # (C, C, B): [i, j, b] = U[b, i, j]
    vh_perm = jnp.transpose(Vh, (1, 2, 0))           # (C, C, B): [j, k, b] = Vh[b, j, k]

    # 128 lane-dense batch columns per grid step when possible; otherwise one block.
    TB = 128 if B % 128 == 0 else B
    grid = (B // TB,)

    num_layers = len(weights)
    kernel = _make_vnet_kernel(num_layers, C)

    in_specs = (
        [pl.BlockSpec(memory_space=pltpu.SMEM)]                       # relubias scalar
        + [
            pl.BlockSpec((C * C, TB), lambda i: (0, i)),              # vhf_t
            pl.BlockSpec((C, TB), lambda i: (0, i)),                  # s_t
            pl.BlockSpec((C, C, TB), lambda i: (0, 0, i)),            # u_perm
            pl.BlockSpec((C, C, TB), lambda i: (0, 0, i)),            # vh_perm
        ]
        + [pl.BlockSpec(w.shape, lambda i: (0, 0)) for w in weights]  # resident weights
    )
    out_specs = pl.BlockSpec((C, C, TB), lambda i: (0, 0, i))

    # Advisory cost estimate so XLA schedules this kernel sensibly next to the SVD.
    mlp_flops = 2 * B * sum(int(w.shape[0]) * int(w.shape[1]) for w in weights)
    recon_flops = 2 * B * C * C * C + 2 * B * C * C
    n_trans = B * (C + sum(int(w.shape[0]) for w in weights[:-1]))    # sigmoid + modReLU recips
    bytes_acc = 4 * (int(vhf_t.size) + int(s_t.size) + int(u_perm.size) + int(vh_perm.size)
                     + sum(int(w.size) for w in weights) + B * C * C) + 4

    y_perm = pl.pallas_call(
        kernel,
        grid=grid,
        out_shape=jax.ShapeDtypeStruct((C, C, B), x.dtype),
        in_specs=in_specs,
        out_specs=out_specs,
        compiler_params=pltpu.CompilerParams(
            dimension_semantics=("parallel",),        # DMA/compute pipelining; 2-TC shard on v7x
            vmem_limit_bytes=32 * 1024 * 1024,        # explicit; actual use is well under 1 MiB
        ),
        cost_estimate=pl.CostEstimate(
            flops=int(mlp_flops + recon_flops),
            transcendentals=int(n_trans),
            bytes_accessed=int(bytes_acc),
        ),
    )(relubias, vhf_t, s_t, u_perm, vh_perm, *weights)

    return jnp.transpose(y_perm, (2, 0, 1))           # back to (B, C, C)


def vnet_reference(x, weights, relubias):
    """Pure-JAX reference mirroring the PyTorch forward semantics (exact divide)."""
    U, S, Vh = jnp.linalg.svd(x, full_matrices=False)
    B, C, _ = x.shape
    h = Vh.reshape(B, C * C)
    b = relubias[0]
    for li, w in enumerate(weights):
        h = h @ w.T                                   # nn.Linear(bias=False)
        if li < len(weights) - 1:
            ax = jnp.abs(h)
            scale = jnp.maximum(ax + b, 0.0) / jnp.where(ax > 0.0, ax, 1.0)
            h = jnp.where(ax > 0.0, scale * h, 0.0)
    conf = jax.nn.sigmoid(jnp.abs(h))
    s_out = conf * S
    return jnp.einsum('bij,bj,bjk->bik', U, s_out, Vh)


if __name__ == "__main__":
    key = jax.random.PRNGKey(0)
    # Batch many small problems per call: per-problem work (8x8) is tiny, so the
    # kernel only shows throughput once launch/DMA overhead is amortised over
    # >=128 lane-dense batch columns (see perf review).
    B, cDim = 256, 8
    svl_sizes = [32, 32]
    sizes = [cDim * cDim] + svl_sizes + [cDim]        # [64, 32, 32, 8]

    keys = jax.random.split(key, 1 + (len(sizes) - 1))
    k_x, k_w = keys[0], keys[1:]

    x = jax.random.normal(k_x, (B, cDim, cDim), dtype=jnp.float32)

    # Deterministic Xavier-uniform init for the bias-free linears,
    # stored in PyTorch layout (out_features, in_features).
    weights = []
    for i in range(len(sizes) - 1):
        fan_in, fan_out = sizes[i], sizes[i + 1]
        limit = (6.0 / (fan_in + fan_out)) ** 0.5
        w = jax.random.uniform(k_w[i], (fan_out, fan_in),
                               minval=-limit, maxval=limit, dtype=jnp.float32)
        weights.append(w)

    # Nonzero bias so the modReLU nonlinearity is actually exercised.
    relubias = jnp.full((1,), -0.05, dtype=jnp.float32)

    K = jnp.int32(cDim)       # unused by forward (kept for signature fidelity)
    th = jnp.float32(0.0)     # unused by forward

    y = vnet_forward(x, K, th, weights, relubias)
    y = jax.block_until_ready(y)

    y_ref = vnet_reference(x, weights, relubias)
    assert y.shape == (B, cDim, cDim)
    # Tolerance accounts for the EUP approximate reciprocal inside modReLU.
    assert jnp.allclose(y, y_ref, atol=1e-2, rtol=1e-2), "Pallas output mismatch vs reference"

    print("KERNEL_OK")
</pallas_src>

<mosaic_0001>
module attributes {stable_mosaic.version = 11 : i64} {
  func.func @kernel(%arg0: i32, %arg1: memref<1xf32, #tpu.memory_space<smem>>, %arg2: memref<64x128xf32, #tpu.memory_space<vmem>>, %arg3: memref<8x128xf32, #tpu.memory_space<vmem>>, %arg4: memref<8x8x128xf32, #tpu.memory_space<vmem>>, %arg5: memref<8x8x128xf32, #tpu.memory_space<vmem>>, %arg6: memref<32x64xf32, #tpu.memory_space<vmem>>, %arg7: memref<32x32xf32, #tpu.memory_space<vmem>>, %arg8: memref<8x32xf32, #tpu.memory_space<vmem>>, %arg9: memref<8x8x128xf32, #tpu.memory_space<vmem>>) attributes {dimension_semantics = [#tpu.dimension_semantics<parallel>], iteration_bounds = array<i64: 2>, scalar_prefetch = 0 : i64, scratch_operands = 0 : i64, tpu.core_type = #tpu.core_type<tc>, window_params = [{transform_indices = @transform_0, window_bounds = array<i64: 1>}, {transform_indices = @transform_1, window_bounds = array<i64: 64, 128>}, {transform_indices = @transform_2, window_bounds = array<i64: 8, 128>}, {transform_indices = @transform_3, window_bounds = array<i64: 8, 8, 128>}, {transform_indices = @transform_4, window_bounds = array<i64: 8, 8, 128>}, {pipeline_mode = #tpu.pipeline_mode<synchronous>, transform_indices = @transform_5, window_bounds = array<i64: 32, 64>}, {pipeline_mode = #tpu.pipeline_mode<synchronous>, transform_indices = @transform_6, window_bounds = array<i64: 32, 32>}, {pipeline_mode = #tpu.pipeline_mode<synchronous>, transform_indices = @transform_7, window_bounds = array<i64: 8, 32>}, {transform_indices = @transform_8, window_bounds = array<i64: 8, 8, 128>}]} {
    %c0 = arith.constant 0 : index
    %0 = memref.load %arg1[%c0] : memref<1xf32, #tpu.memory_space<smem>>
    %c0_0 = arith.constant 0 : index
    %c0_1 = arith.constant 0 : index
    %1 = vector.load %arg2[%c0_0, %c0_1] : memref<64x128xf32, #tpu.memory_space<vmem>>, vector<64x128xf32>
    %c0_2 = arith.constant 0 : index
    %c0_3 = arith.constant 0 : index
    %2 = vector.load %arg6[%c0_2, %c0_3] : memref<32x64xf32, #tpu.memory_space<vmem>>, vector<32x64xf32>
    %cst = arith.constant dense<0.000000e+00> : vector<32x128xf32>
    %3 = tpu.matmul %2, %1, %cst {dimension_numbers = #tpu.dot_dimension_numbers<[1], [0], [0], [1], [0, 0, 1, 1], [], []>} : vector<32x64xf32>, vector<64x128xf32>, vector<32x128xf32> -> vector<32x128xf32>
    %4 = math.absf %3 : vector<32x128xf32>
    %5 = vector.broadcast %0 : f32 to vector<32x128xf32>
    %6 = arith.addf %4, %5 : vector<32x128xf32>
    %cst_4 = arith.constant 0.000000e+00 : f32
    %7 = vector.broadcast %cst_4 : f32 to vector<32x128xf32>
    %8 = arith.maximumf %6, %7 : vector<32x128xf32>
    %9 = tpu.reciprocal %4 {approx = true} : vector<32x128xf32> -> vector<32x128xf32>
    %10 = arith.mulf %8, %9 : vector<32x128xf32>
    %cst_5 = arith.constant 0.000000e+00 : f32
    %11 = vector.broadcast %cst_5 : f32 to vector<32x128xf32>
    %12 = arith.cmpf ogt, %4, %11 : vector<32x128xf32>
    %13 = arith.mulf %10, %3 : vector<32x128xf32>
    %cst_6 = arith.constant 0.000000e+00 : f32
    %14 = vector.broadcast %cst_6 : f32 to vector<32x128xf32>
    %15 = arith.select %12, %13, %14 : vector<32x128xi1>, vector<32x128xf32>
    %c0_7 = arith.constant 0 : index
    %c0_8 = arith.constant 0 : index
    %16 = vector.load %arg7[%c0_7, %c0_8] : memref<32x32xf32, #tpu.memory_space<vmem>>, vector<32x32xf32>
    %cst_9 = arith.constant dense<0.000000e+00> : vector<32x128xf32>
    %17 = tpu.matmul %16, %15, %cst_9 {dimension_numbers = #tpu.dot_dimension_numbers<[1], [0], [0], [1], [0, 0, 1, 1], [], []>} : vector<32x32xf32>, vector<32x128xf32>, vector<32x128xf32> -> vector<32x128xf32>
    %18 = math.absf %17 : vector<32x128xf32>
    %19 = vector.broadcast %0 : f32 to vector<32x128xf32>
    %20 = arith.addf %18, %19 : vector<32x128xf32>
    %cst_10 = arith.constant 0.000000e+00 : f32
    %21 = vector.broadcast %cst_10 : f32 to vector<32x128xf32>
    %22 = arith.maximumf %20, %21 : vector<32x128xf32>
    %23 = tpu.reciprocal %18 {approx = true} : vector<32x128xf32> -> vector<32x128xf32>
    %24 = arith.mulf %22, %23 : vector<32x128xf32>
    %cst_11 = arith.constant 0.000000e+00 : f32
    %25 = vector.broadcast %cst_11 : f32 to vector<32x128xf32>
    %26 = arith.cmpf ogt, %18, %25 : vector<32x128xf32>
    %27 = arith.mulf %24, %17 : vector<32x128xf32>
    %cst_12 = arith.constant 0.000000e+00 : f32
    %28 = vector.broadcast %cst_12 : f32 to vector<32x128xf32>
    %29 = arith.select %26, %27, %28 : vector<32x128xi1>, vector<32x128xf32>
    %c0_13 = arith.constant 0 : index
    %c0_14 = arith.constant 0 : index
    %30 = vector.load %arg8[%c0_13, %c0_14] : memref<8x32xf32, #tpu.memory_space<vmem>>, vector<8x32xf32>
    %cst_15 = arith.constant dense<0.000000e+00> : vector<8x128xf32>
    %31 = tpu.matmul %30, %29, %cst_15 {dimension_numbers = #tpu.dot_dimension_numbers<[1], [0], [0], [1], [0, 0, 1, 1], [], []>} : vector<8x32xf32>, vector<32x128xf32>, vector<8x128xf32> -> vector<8x128xf32>
    %32 = math.absf %31 : vector<8x128xf32>
    %33 = arith.negf %32 : vector<8x128xf32>
    %34 = math.exp %33 : vector<8x128xf32>
    %cst_16 = arith.constant 1.000000e+00 : f32
    %35 = vector.broadcast %cst_16 : f32 to vector<8x128xf32>
    %36 = arith.addf %35, %34 : vector<8x128xf32>
    %37 = arith.divf %35, %36 : vector<8x128xf32>
    %c0_17 = arith.constant 0 : index
    %c0_18 = arith.constant 0 : index
    %38 = vector.load %arg3[%c0_17, %c0_18] : memref<8x128xf32, #tpu.memory_space<vmem>>, vector<8x128xf32>
    %39 = arith.mulf %37, %38 : vector<8x128xf32>
    %c0_19 = arith.constant 0 : index
    %c0_20 = arith.constant 0 : index
    %c0_21 = arith.constant 0 : index
    %40 = vector.load %arg4[%c0_19, %c0_20, %c0_21] : memref<8x8x128xf32, #tpu.memory_space<vmem>>, vector<8x8x128xf32>
    %41 = vector.shape_cast %39 : vector<8x128xf32> to vector<1x8x128xf32>
    %42 = vector.broadcast %41 : vector<1x8x128xf32> to vector<8x8x128xf32>
    %43 = arith.mulf %40, %42 : vector<8x8x128xf32>
    %c0_22 = arith.constant 0 : index
    %c0_23 = arith.constant 0 : index
    %c0_24 = arith.constant 0 : index
    %44 = vector.load %arg5[%c0_22, %c0_23, %c0_24] : memref<8x8x128xf32, #tpu.memory_space<vmem>>, vector<8x8x128xf32>
    %45 = vector.extract_strided_slice %43 {offsets = [0, 0, 0], sizes = [8, 1, 128], strides = [1, 1, 1]} : vector<8x8x128xf32> to vector<8x1x128xf32>
    %46 = vector.extract_strided_slice %44 {offsets = [0, 0, 0], sizes = [1, 8, 128], strides = [1, 1, 1]} : vector<8x8x128xf32> to vector<1x8x128xf32>
    %47 = vector.broadcast %45 : vector<8x1x128xf32> to vector<8x8x128xf32>
    %48 = vector.broadcast %46 : vector<1x8x128xf32> to vector<8x8x128xf32>
    %49 = arith.mulf %47, %48 : vector<8x8x128xf32>
    %50 = vector.extract_strided_slice %43 {offsets = [0, 1, 0], sizes = [8, 1, 128], strides = [1, 1, 1]} : vector<8x8x128xf32> to vector<8x1x128xf32>
    %51 = vector.extract_strided_slice %44 {offsets = [1, 0, 0], sizes = [1, 8, 128], strides = [1, 1, 1]} : vector<8x8x128xf32> to vector<1x8x128xf32>
    %52 = vector.broadcast %50 : vector<8x1x128xf32> to vector<8x8x128xf32>
    %53 = vector.broadcast %51 : vector<1x8x128xf32> to vector<8x8x128xf32>
    %54 = arith.mulf %52, %53 : vector<8x8x128xf32>
    %55 = arith.addf %49, %54 : vector<8x8x128xf32>
    %56 = vector.extract_strided_slice %43 {offsets = [0, 2, 0], sizes = [8, 1, 128], strides = [1, 1, 1]} : vector<8x8x128xf32> to vector<8x1x128xf32>
    %57 = vector.extract_strided_slice %44 {offsets = [2, 0, 0], sizes = [1, 8, 128], strides = [1, 1, 1]} : vector<8x8x128xf32> to vector<1x8x128xf32>
    %58 = vector.broadcast %56 : vector<8x1x128xf32> to vector<8x8x128xf32>
    %59 = vector.broadcast %57 : vector<1x8x128xf32> to vector<8x8x128xf32>
    %60 = arith.mulf %58, %59 : vector<8x8x128xf32>
    %61 = arith.addf %55, %60 : vector<8x8x128xf32>
    %62 = vector.extract_strided_slice %43 {offsets = [0, 3, 0], sizes = [8, 1, 128], strides = [1, 1, 1]} : vector<8x8x128xf32> to vector<8x1x128xf32>
    %63 = vector.extract_strided_slice %44 {offsets = [3, 0, 0], sizes = [1, 8, 128], strides = [1, 1, 1]} : vector<8x8x128xf32> to vector<1x8x128xf32>
    %64 = vector.broadcast %62 : vector<8x1x128xf32> to vector<8x8x128xf32>
    %65 = vector.broadcast %63 : vector<1x8x128xf32> to vector<8x8x128xf32>
    %66 = arith.mulf %64, %65 : vector<8x8x128xf32>
    %67 = arith.addf %61, %66 : vector<8x8x128xf32>
    %68 = vector.extract_strided_slice %43 {offsets = [0, 4, 0], sizes = [8, 1, 128], strides = [1, 1, 1]} : vector<8x8x128xf32> to vector<8x1x128xf32>
    %69 = vector.extract_strided_slice %44 {offsets = [4, 0, 0], sizes = [1, 8, 128], strides = [1, 1, 1]} : vector<8x8x128xf32> to vector<1x8x128xf32>
    %70 = vector.broadcast %68 : vector<8x1x128xf32> to vector<8x8x128xf32>
    %71 = vector.broadcast %69 : vector<1x8x128xf32> to vector<8x8x128xf32>
    %72 = arith.mulf %70, %71 : vector<8x8x128xf32>
    %73 = arith.addf %67, %72 : vector<8x8x128xf32>
    %74 = vector.extract_strided_slice %43 {offsets = [0, 5, 0], sizes = [8, 1, 128], strides = [1, 1, 1]} : vector<8x8x128xf32> to vector<8x1x128xf32>
    %75 = vector.extract_strided_slice %44 {offsets = [5, 0, 0], sizes = [1, 8, 128], strides = [1, 1, 1]} : vector<8x8x128xf32> to vector<1x8x128xf32>
    %76 = vector.broadcast %74 : vector<8x1x128xf32> to vector<8x8x128xf32>
    %77 = vector.broadcast %75 : vector<1x8x128xf32> to vector<8x8x128xf32>
    %78 = arith.mulf %76, %77 : vector<8x8x128xf32>
    %79 = arith.addf %73, %78 : vector<8x8x128xf32>
    %80 = vector.extract_strided_slice %43 {offsets = [0, 6, 0], sizes = [8, 1, 128], strides = [1, 1, 1]} : vector<8x8x128xf32> to vector<8x1x128xf32>
    %81 = vector.extract_strided_slice %44 {offsets = [6, 0, 0], sizes = [1, 8, 128], strides = [1, 1, 1]} : vector<8x8x128xf32> to vector<1x8x128xf32>
    %82 = vector.broadcast %80 : vector<8x1x128xf32> to vector<8x8x128xf32>
    %83 = vector.broadcast %81 : vector<1x8x128xf32> to vector<8x8x128xf32>
    %84 = arith.mulf %82, %83 : vector<8x8x128xf32>
    %85 = arith.addf %79, %84 : vector<8x8x128xf32>
    %86 = vector.extract_strided_slice %43 {offsets = [0, 7, 0], sizes = [8, 1, 128], strides = [1, 1, 1]} : vector<8x8x128xf32> to vector<8x1x128xf32>
    %87 = vector.extract_strided_slice %44 {offsets = [7, 0, 0], sizes = [1, 8, 128], strides = [1, 1, 1]} : vector<8x8x128xf32> to vector<1x8x128xf32>
    %88 = vector.broadcast %86 : vector<8x1x128xf32> to vector<8x8x128xf32>
    %89 = vector.broadcast %87 : vector<1x8x128xf32> to vector<8x8x128xf32>
    %90 = arith.mulf %88, %89 : vector<8x8x128xf32>
    %91 = arith.addf %85, %90 : vector<8x8x128xf32>
    %c0_25 = arith.constant 0 : index
    %c0_26 = arith.constant 0 : index
    %c0_27 = arith.constant 0 : index
    %92 = vector.load %arg9[%c0_25, %c0_26, %c0_27] : memref<8x8x128xf32, #tpu.memory_space<vmem>>, vector<8x8x128xf32>
    tpu.vector_store %arg9[%c0_25, %c0_26, %c0_27], %91 {strides = array<i32>} : memref<8x8x128xf32, #tpu.memory_space<vmem>>, vector<8x8x128xf32>,
    return
  }
  func.func @transform_0(%arg0: i32) -> i32 {
    %c0_i32 = arith.constant 0 : i32
    %c0_i32_0 = arith.constant 0 : i32
    return %c0_i32 : i32
  }
  func.func @transform_1(%arg0: i32) -> (i32, i32) {
    %c0_i32 = arith.constant 0 : i32
    %c0_i32_0 = arith.constant 0 : i32
    return %c0_i32, %arg0 : i32, i32
  }
  func.func @transform_2(%arg0: i32) -> (i32, i32) {
    %c0_i32 = arith.constant 0 : i32
    %c0_i32_0 = arith.constant 0 : i32
    return %c0_i32, %arg0 : i32, i32
  }
  func.func @transform_3(%arg0: i32) -> (i32, i32, i32) {
    %c0_i32 = arith.constant 0 : i32
    %c0_i32_0 = arith.constant 0 : i32
    %c0_i32_1 = arith.constant 0 : i32
    return %c0_i32, %c0_i32_0, %arg0 : i32, i32, i32
  }
  func.func @transform_4(%arg0: i32) -> (i32, i32, i32) {
    %c0_i32 = arith.constant 0 : i32
    %c0_i32_0 = arith.constant 0 : i32
    %c0_i32_1 = arith.constant 0 : i32
    return %c0_i32, %c0_i32_0, %arg0 : i32, i32, i32
  }
  func.func @transform_5(%arg0: i32) -> (i32, i32) {
    %c0_i32 = arith.constant 0 : i32
    %c0_i32_0 = arith.constant 0 : i32
    %c0_i32_1 = arith.constant 0 : i32
    return %c0_i32, %c0_i32_0 : i32, i32
  }
  func.func @transform_6(%arg0: i32) -> (i32, i32) {
    %c0_i32 = arith.constant 0 : i32
    %c0_i32_0 = arith.constant 0 : i32
    %c0_i32_1 = arith.constant 0 : i32
    return %c0_i32, %c0_i32_0 : i32, i32
  }
  func.func @transform_7(%arg0: i32) -> (i32, i32) {
    %c0_i32 = arith.constant 0 : i32
    %c0_i32_0 = arith.constant 0 : i32
    %c0_i32_1 = arith.constant 0 : i32
    return %c0_i32, %c0_i32_0 : i32, i32
  }
  func.func @transform_8(%arg0: i32) -> (i32, i32, i32) {
    %c0_i32 = arith.constant 0 : i32
    %c0_i32_0 = arith.constant 0 : i32
    %c0_i32_1 = arith.constant 0 : i32
    return %c0_i32, %c0_i32_0, %arg0 : i32, i32, i32
  }
}

</mosaic_0001>

<llo_original>
// kernel: tpu_custom_call.1
$region0: #{tpu_custom_call.1}
  #allocation0 [shape = 'u32[]', space=smem, size = 0x4, offset = 0x4, fixed_abs, tag = 'smem constant byte address 0x4 - core index']
  #allocation1 [shape = 'u32[72,128]{1,0:T(1,128)}', space=vmem, size = 0x9000, scoped, tag = 'internal scratch']
  #allocation2 [shape = 'f32[1]{0:T(128)S(6)}', space=smem, size = 0x200, scoped, tag = 'scoped memory for tpu_custom_call.1']
  %s0 = inlined_call_operand.<no memory space> [shape: f32[1], index: 0, kind: input, shape index: {}]
  %s1 = inlined_call_operand.hbm [shape: f32[64,256], index: 1, kind: input, shape index: {}]
  %s2 = inlined_call_operand.hbm [shape: f32[8,256], index: 2, kind: input, shape index: {}]
  %s3 = inlined_call_operand.hbm [shape: f32[8,8,256], index: 3, kind: input, shape index: {}]
  %s4 = inlined_call_operand.hbm [shape: f32[8,8,256], index: 4, kind: input, shape index: {}]
  %s5 = inlined_call_operand.hbm [shape: f32[32,64], index: 5, kind: input, shape index: {}]
  %s6 = inlined_call_operand.hbm [shape: f32[32,32], index: 6, kind: input, shape index: {}]
  %s7 = inlined_call_operand.hbm [shape: f32[8,32], index: 7, kind: input, shape index: {}]
  %s8 = inlined_call_operand.hbm [shape: f32[8,8,256], index: 8, kind: output, shape index: {}]
  %s9 = sld [smem:[#allocation0]]
  $region93: #{tpu_custom_call.1} parent=0
    _
  %s11 = ssub.s32 1, %s9
  %s12 = scalar_select 0, %s11, %s9
  %13 = sst [smem:[#allocation2]] %s0
  $region1: #{tpu_custom_call.1} parent=0
    #allocation3 [shape = 'u8[65536]{0}', space=vmem, size = 0x10000, scoped, tag = 'input window, operand 1']
    #allocation4 [shape = 's32[2]{0}', space=sflag, size = 0x8, scoped, tag = 'scoped memory for tpu_custom_call.1']
    #allocation5 [shape = 's32[2]{0}', space=sflag, size = 0x8, scoped, tag = 'scoped memory for tpu_custom_call.1']
    #allocation6 [shape = 'u8[8192]{0}', space=vmem, size = 0x2000, scoped, tag = 'input window, operand 2']
    #allocation7 [shape = 's32[2]{0}', space=sflag, size = 0x8, scoped, tag = 'scoped memory for tpu_custom_call.1']
    #allocation8 [shape = 'u8[65536]{0}', space=vmem, size = 0x10000, scoped, tag = 'input window, operand 3']
    #allocation9 [shape = 'u8[65536]{0}', space=vmem, size = 0x10000, scoped, tag = 'input window, operand 4']
    #allocation10 [shape = 's32[2]{0}', space=sflag, size = 0x8, scoped, tag = 'scoped memory for tpu_custom_call.1']
    #allocation11 [shape = 'u8[16384]{0}', space=vmem, size = 0x4000, scoped, tag = 'input window, operand 5, single buffered']
    #allocation12 [shape = 'u8[16384]{0}', space=vmem, size = 0x4000, scoped, tag = 'input window, operand 6, single buffered']
    #allocation13 [shape = 's32[1]{0}', space=sflag, size = 0x4, scoped, tag = 'scoped memory for tpu_custom_call.1']
    #allocation14 [shape = 'u8[4096]{0}', space=vmem, size = 0x1000, scoped, tag = 'input window, operand 7, single buffered']
    #allocation15 [shape = 'u8[65536]{0}', space=vmem, size = 0x10000, scoped, tag = 'output window, operand 0']
    %14 = vsyncpa [#allocation4], 0
    %s15 = scalar_lea.sflag [#allocation4], 1
    %16 = vsyncpa %s15, 0
    %17 = vsyncpa [#allocation7], 0
    %s18 = scalar_lea.sflag [#allocation7], 1
    %19 = vsyncpa %s18, 0
    %20 = vsyncpa [#allocation10], 0
    %s21 = scalar_lea.sflag [#allocation10], 1
    %22 = vsyncpa %s21, 0
    %23 = vsyncpa [#allocation13], 0
    %24 = vsyncpa [#allocation5], 0
    %s25 = scalar_lea.sflag [#allocation5], 1
    %26 = vsyncpa %s25, 0
    loop: start=0, step=1, limit=4
    $region2: #{tpu_custom_call.1} parent=1 // loop_pre_header
      _
    $region3: #{tpu_custom_call.1} parent=1 // loop_header
      %s28 = sphi 0, %s32
      %p29 = scmp.ge.s32.totalorder %s28, 4
      %s36 = sphi 0, %s36
      %s38 = sphi 0, %s36
      %s39 = sphi 0, %s38
      %s53 = sphi 0, %s39
      %s59 = sphi 0, %s61
      %s62 = sphi 0, %s59
      %s63 = sphi 0, %s62
      %s79 = sphi 0, %s63
      %s85 = sphi 0, %s87
      %s88 = sphi 0, %s85
      %s89 = sphi 0, %s88
      %s105 = sphi 0, %s89
      %s111 = sphi 0, %s113
      %s114 = sphi 0, %s111
      %s115 = sphi 0, %s114
      %s131 = sphi 0, %s115
      %s137 = sphi 0, %s139
      %s140 = sphi 0, %s137
      %s141 = sphi 0, %s140
      %s157 = sphi 0, %s141
      %s161 = sphi 0, %s161
      %s163 = sphi 0, %s161
      %s164 = sphi 0, %s163
      %s178 = sphi 0, %s164
      %s182 = sphi 0, %s182
      %s184 = sphi 0, %s182
      %s185 = sphi 0, %s184
      %s199 = sphi 0, %s185
      %s203 = sphi 0, %s203
      %s205 = sphi 0, %s203
      %s206 = sphi 0, %s205
      %s220 = sphi 0, %s206
      %s226 = sphi 0, %s228
      %s229 = sphi 0, %s226
      %s230 = sphi 0, %s229
      %s246 = sphi 0, %s230
    $region4: #{tpu_custom_call.1} parent=1 // loop_header_branch
      %31 = sbr.rel (%p29) target = $region8
    $region5: #{tpu_custom_call.1} parent=1 // loop_body
      %s33 = ssub.s32 %s28, 1
      %s34 = ssub.s32 %s28, 2
      %s35 = sadd.s32 %s28, 1
      %s37 = sadd.s32 %s36, 1
      %p40 = scmp.eq.s32.totalorder %s28, 1
      %p41 = scmp.ne.s32.totalorder %s36, %s38
      %p42 = scmp.eq.s32.totalorder %s28, 0
      %p43 = por %p41, %p42
      %p44 = scmp.ne.s32.totalorder %s36, %s38
      %p45 = scmp.eq.s32.totalorder %s33, 1
      %p46 = por %p44, %p45
      %p47 = scmp.ne.s32.totalorder %s38, %s39
      %p48 = scmp.eq.s32.totalorder %s33, 0
      %p49 = por %p47, %p48
      %p50 = scmp.ne.s32.totalorder %s38, %s39
      %p51 = scmp.eq.s32.totalorder %s34, 1
      %p52 = por %p50, %p51
      %p54 = scmp.ne.s32.totalorder %s39, %s53
      %p55 = scmp.eq.s32.totalorder %s34, 0
      %p56 = por %p54, %p55
      %s57 = ssub.s32 %s28, %s35
      %p58 = scmp.eq.s32.totalorder %s57, 0
      %s60 = sadd.s32 %s59, 1
      %s61 = scalar_select %p58, %s59, %s60
      %p64 = pneg %p58
      %p65 = scmp.eq.s32.totalorder %s28, 1
      %p66 = por %p64, %p65
      %p67 = scmp.ne.s32.totalorder %s59, %s62
      %p68 = scmp.eq.s32.totalorder %s28, 0
      %p69 = por %p67, %p68
      %p70 = scmp.ne.s32.totalorder %s59, %s62
      %p71 = scmp.eq.s32.totalorder %s33, 1
      %p72 = por %p70, %p71
      %p73 = scmp.ne.s32.totalorder %s62, %s63
      %p74 = scmp.eq.s32.totalorder %s33, 0
      %p75 = por %p73, %p74
      %p76 = scmp.ne.s32.totalorder %s62, %s63
      %p77 = scmp.eq.s32.totalorder %s34, 1
      %p78 = por %p76, %p77
      %p80 = scmp.ne.s32.totalorder %s63, %s79
      %p81 = scmp.eq.s32.totalorder %s34, 0
      %p82 = por %p80, %p81
      %s83 = ssub.s32 %s28, %s35
      %p84 = scmp.eq.s32.totalorder %s83, 0
      %s86 = sadd.s32 %s85, 1
      %s87 = scalar_select %p84, %s85, %s86
      %p90 = pneg %p84
      %p91 = scmp.eq.s32.totalorder %s28, 1
      %p92 = por %p90, %p91
      %p93 = scmp.ne.s32.totalorder %s85, %s88
      %p94 = scmp.eq.s32.totalorder %s28, 0
      %p95 = por %p93, %p94
      %p96 = scmp.ne.s32.totalorder %s85, %s88
      %p97 = scmp.eq.s32.totalorder %s33, 1
      %p98 = por %p96, %p97
      %p99 = scmp.ne.s32.totalorder %s88, %s89
      %p100 = scmp.eq.s32.totalorder %s33, 0
      %p101 = por %p99, %p100
      %p102 = scmp.ne.s32.totalorder %s88, %s89
      %p103 = scmp.eq.s32.totalorder %s34, 1
      %p104 = por %p102, %p103
      %p106 = scmp.ne.s32.totalorder %s89, %s105
      %p107 = scmp.eq.s32.totalorder %s34, 0
      %p108 = por %p106, %p107
      %s109 = ssub.s32 %s28, %s35
      %p110 = scmp.eq.s32.totalorder %s109, 0
      %s112 = sadd.s32 %s111, 1
      %s113 = scalar_select %p110, %s111, %s112
      %p116 = pneg %p110
      %p117 = scmp.eq.s32.totalorder %s28, 1
      %p118 = por %p116, %p117
      %p119 = scmp.ne.s32.totalorder %s111, %s114
      %p120 = scmp.eq.s32.totalorder %s28, 0
      %p121 = por %p119, %p120
      %p122 = scmp.ne.s32.totalorder %s111, %s114
      %p123 = scmp.eq.s32.totalorder %s33, 1
      %p124 = por %p122, %p123
      %p125 = scmp.ne.s32.totalorder %s114, %s115
      %p126 = scmp.eq.s32.totalorder %s33, 0
      %p127 = por %p125, %p126
      %p128 = scmp.ne.s32.totalorder %s114, %s115
      %p129 = scmp.eq.s32.totalorder %s34, 1
      %p130 = por %p128, %p129
      %p132 = scmp.ne.s32.totalorder %s115, %s131
      %p133 = scmp.eq.s32.totalorder %s34, 0
      %p134 = por %p132, %p133
      %s135 = ssub.s32 %s28, %s35
      %p136 = scmp.eq.s32.totalorder %s135, 0
      %s138 = sadd.s32 %s137, 1
      %s139 = scalar_select %p136, %s137, %s138
      %p142 = pneg %p136
      %p143 = scmp.eq.s32.totalorder %s28, 1
      %p144 = por %p142, %p143
      %p145 = scmp.ne.s32.totalorder %s137, %s140
      %p146 = scmp.eq.s32.totalorder %s28, 0
      %p147 = por %p145, %p146
      %p148 = scmp.ne.s32.totalorder %s137, %s140
      %p149 = scmp.eq.s32.totalorder %s33, 1
      %p150 = por %p148, %p149
      %p151 = scmp.ne.s32.totalorder %s140, %s141
      %p152 = scmp.eq.s32.totalorder %s33, 0
      %p153 = por %p151, %p152
      %p154 = scmp.ne.s32.totalorder %s140, %s141
      %p155 = scmp.eq.s32.totalorder %s34, 1
      %p156 = por %p154, %p155
      %p158 = scmp.ne.s32.totalorder %s141, %s157
      %p159 = scmp.eq.s32.totalorder %s34, 0
      %p160 = por %p158, %p159
      %s162 = sadd.s32 %s161, 1
      %p165 = scmp.eq.s32.totalorder %s28, 1
      %p166 = scmp.ne.s32.totalorder %s161, %s163
      %p167 = scmp.eq.s32.totalorder %s28, 0
      %p168 = por %p166, %p167
      %p169 = scmp.ne.s32.totalorder %s161, %s163
      %p170 = scmp.eq.s32.totalorder %s33, 1
      %p171 = por %p169, %p170
      %p172 = scmp.ne.s32.totalorder %s163, %s164
      %p173 = scmp.eq.s32.totalorder %s33, 0
      %p174 = por %p172, %p173
      %p175 = scmp.ne.s32.totalorder %s163, %s164
      %p176 = scmp.eq.s32.totalorder %s34, 1
      %p177 = por %p175, %p176
      %p179 = scmp.ne.s32.totalorder %s164, %s178
      %p180 = scmp.eq.s32.totalorder %s34, 0
      %p181 = por %p179, %p180
      %s183 = sadd.s32 %s182, 1
      %p186 = scmp.eq.s32.totalorder %s28, 1
      %p187 = scmp.ne.s32.totalorder %s182, %s184
      %p188 = scmp.eq.s32.totalorder %s28, 0
      %p189 = por %p187, %p188
      %p190 = scmp.ne.s32.totalorder %s182, %s184
      %p191 = scmp.eq.s32.totalorder %s33, 1
      %p192 = por %p190, %p191
      %p193 = scmp.ne.s32.totalorder %s184, %s185
      %p194 = scmp.eq.s32.totalorder %s33, 0
      %p195 = por %p193, %p194
      %p196 = scmp.ne.s32.totalorder %s184, %s185
      %p197 = scmp.eq.s32.totalorder %s34, 1
      %p198 = por %p196, %p197
      %p200 = scmp.ne.s32.totalorder %s185, %s199
      %p201 = scmp.eq.s32.totalorder %s34, 0
      %p202 = por %p200, %p201
      %s204 = sadd.s32 %s203, 1
      %p207 = scmp.eq.s32.totalorder %s28, 1
      %p208 = scmp.ne.s32.totalorder %s203, %s205
      %p209 = scmp.eq.s32.totalorder %s28, 0
      %p210 = por %p208, %p209
      %p211 = scmp.ne.s32.totalorder %s203, %s205
      %p212 = scmp.eq.s32.totalorder %s33, 1
      %p213 = por %p211, %p212
      %p214 = scmp.ne.s32.totalorder %s205, %s206
      %p215 = scmp.eq.s32.totalorder %s33, 0
      %p216 = por %p214, %p215
      %p217 = scmp.ne.s32.totalorder %s205, %s206
      %p218 = scmp.eq.s32.totalorder %s34, 1
      %p219 = por %p217, %p218
      %p221 = scmp.ne.s32.totalorder %s206, %s220
      %p222 = scmp.eq.s32.totalorder %s34, 0
      %p223 = por %p221, %p222
      %s224 = ssub.s32 %s28, %s35
      %p225 = scmp.eq.s32.totalorder %s224, 0
      %s227 = sadd.s32 %s226, 1
      %s228 = scalar_select %p225, %s226, %s227
      %p231 = pneg %p225
      %p232 = scmp.eq.s32.totalorder %s28, 1
      %p233 = por %p231, %p232
      %p234 = scmp.ne.s32.totalorder %s226, %s229
      %p235 = scmp.eq.s32.totalorder %s28, 0
      %p236 = por %p234, %p235
      %p237 = scmp.ne.s32.totalorder %s226, %s229
      %p238 = scmp.eq.s32.totalorder %s33, 1
      %p239 = por %p237, %p238
      %p240 = scmp.ne.s32.totalorder %s229, %s230
      %p241 = scmp.eq.s32.totalorder %s33, 0
      %p242 = por %p240, %p241
      %p243 = scmp.ne.s32.totalorder %s229, %s230
      %p244 = scmp.eq.s32.totalorder %s34, 1
      %p245 = por %p243, %p244
      %p247 = scmp.ne.s32.totalorder %s230, %s246
      %p248 = scmp.eq.s32.totalorder %s34, 0
      %p249 = por %p247, %p248
      %p250 = scmp.le.s32.totalorder 1, %s28
      %p251 = scmp.lt.s32.totalorder %s28, 3
      %p252 = pnand %p250, %p251
      %p253 = pneg %p252
      // Predicated region
      $region9: #{tpu_custom_call.1} parent=5 // pred_check
        _
      $region10: #{tpu_custom_call.1} parent=5 // pred_check_branch
        %255 = sbr.rel (%p252) target = $region12
      $region11: #{tpu_custom_call.1} parent=5 // pred_region
        %s256 = ssub.s32 %s28, 1
        // Predicated region
        $region13: #{tpu_custom_call.1} parent=11 // pred_check
          %p257 = pneg %p49
        $region14: #{tpu_custom_call.1} parent=11 // pred_check_branch
          %259 = sbr.rel (%p257) target = $region16
        $region15: #{tpu_custom_call.1} parent=11 // pred_region
          _
        $region16: #{tpu_custom_call.1} parent=11 // pred_fallthru
          _
        // Predicated region
        $region17: #{tpu_custom_call.1} parent=11 // pred_check
          %p260 = pneg %p174
        $region18: #{tpu_custom_call.1} parent=11 // pred_check_branch
          %262 = sbr.rel (%p260) target = $region20
        $region19: #{tpu_custom_call.1} parent=11 // pred_region
          %264 = vsyncadd [#allocation10], 0
          %s265 = sshll.u32 %s5, 4
          %s266 = int_to_ptr.hbm [resolvable:$true] %s265
          %s267 = sshll.u32 [#allocation11], 4
          %s268 = int_to_ptr.vmem [resolvable:$true] %s267
          %273 = dma.hbm_to_vmem [thread:$0]  %s266, 512, %s268, [#allocation10], 128, 128, 8
        $region20: #{tpu_custom_call.1} parent=11 // pred_fallthru
          _
        // Predicated region
        $region21: #{tpu_custom_call.1} parent=11 // pred_check
          %p274 = pneg %p195
        $region22: #{tpu_custom_call.1} parent=11 // pred_check_branch
          %276 = sbr.rel (%p274) target = $region24
        $region23: #{tpu_custom_call.1} parent=11 // pred_region
          %278 = vsyncadd [#allocation13], 0
          %s279 = sshll.u32 %s6, 4
          %s280 = int_to_ptr.hbm [resolvable:$true] %s279
          %s281 = sshll.u32 [#allocation12], 4
          %s282 = int_to_ptr.vmem [resolvable:$true] %s281
          %287 = dma.hbm_to_vmem [thread:$0]  %s280, 512, %s282, [#allocation13], 128, 128, 8
        $region24: #{tpu_custom_call.1} parent=11 // pred_fallthru
          _
        // Predicated region
        $region25: #{tpu_custom_call.1} parent=11 // pred_check
          %p288 = pneg %p216
        $region26: #{tpu_custom_call.1} parent=11 // pred_check_branch
          %290 = sbr.rel (%p288) target = $region28
        $region27: #{tpu_custom_call.1} parent=11 // pred_region
          %292 = vsyncadd [#allocation13], 0
          %s294 = sshll.u32 %s7, 4
          %s295 = int_to_ptr.hbm [resolvable:$true] %s294
          %s296 = sshll.u32 [#allocation14], 4
          %s297 = int_to_ptr.vmem [resolvable:$true] %s296
          %299 = dma.hbm_to_vmem [thread:$0]  %s295, 128, %s297, [#allocation13]
        $region28: #{tpu_custom_call.1} parent=11 // pred_fallthru
          _
      $region12: #{tpu_custom_call.1} parent=5 // pred_fallthru
        _
      %p300 = scmp.lt.s32.totalorder %s28, 2
      // Predicated region
      $region29: #{tpu_custom_call.1} parent=5 // pred_check
        %p301 = pneg %p300
      $region30: #{tpu_custom_call.1} parent=5 // pred_check_branch
        %303 = sbr.rel (%p301) target = $region32
      $region31: #{tpu_custom_call.1} parent=5 // pred_region
        // Predicated region
        $region33: #{tpu_custom_call.1} parent=31 // pred_check
          %p304 = pneg %p69
        $region34: #{tpu_custom_call.1} parent=31 // pred_check_branch
          %306 = sbr.rel (%p304) target = $region36
        $region35: #{tpu_custom_call.1} parent=31 // pred_region
          %s307 = sand.u32 %s59, 1
          %s308 = scalar_lea.sflag [#allocation4], %s307
          %s309 = sand.u32 %s59, 1
          %s310 = smul.addr %s309, 64
          %s311 = scalar_lea.vmem [#allocation3], %s310
          %313 = vsyncadd %s308, 0
          %s314 = smul.addr %s28, 8
          %s315 = scalar_lea.hbm %s1, %s314
          %s316 = sshll.u32 %s315, 4
          %s317 = int_to_ptr.hbm [resolvable:$true] %s316
          %s318 = sshll.u32 %s311, 4
          %s319 = int_to_ptr.vmem [resolvable:$true] %s318
          %324 = dma.hbm_to_vmem [thread:$0]  %s317, 1024, %s319, %s308, 256, 128, 8
        $region36: #{tpu_custom_call.1} parent=31 // pred_fallthru
          _
        // Predicated region
        $region37: #{tpu_custom_call.1} parent=31 // pred_check
          %p325 = pneg %p95
        $region38: #{tpu_custom_call.1} parent=31 // pred_check_branch
          %327 = sbr.rel (%p325) target = $region40
        $region39: #{tpu_custom_call.1} parent=31 // pred_region
          %s328 = sand.u32 %s28, 1
          %s329 = scalar_lea.sflag [#allocation7], %s328
          %s330 = sand.u32 %s85, 1
          %s331 = smul.addr %s330, 8
          %s332 = scalar_lea.vmem [#allocation6], %s331
          %334 = vsyncadd %s329, 0
          %s335 = smul.addr %s28, 8
          %s336 = scalar_lea.hbm %s2, %s335
          %s338 = sshll.u32 %s336, 4
          %s339 = int_to_ptr.hbm [resolvable:$true] %s338
          %s340 = sshll.u32 %s332, 4
          %s341 = int_to_ptr.vmem [resolvable:$true] %s340
          %343 = dma.hbm_to_vmem [thread:$0]  %s339, 128, %s341, %s329
        $region40: #{tpu_custom_call.1} parent=31 // pred_fallthru
          _
        // Predicated region
        $region41: #{tpu_custom_call.1} parent=31 // pred_check
          %p344 = pneg %p121
        $region42: #{tpu_custom_call.1} parent=31 // pred_check_branch
          %346 = sbr.rel (%p344) target = $region44
        $region43: #{tpu_custom_call.1} parent=31 // pred_region
          %s347 = sand.u32 %s28, 1
          %s348 = scalar_lea.sflag [#allocation7], %s347
          %s349 = sand.u32 %s111, 1
          %s350 = smul.addr %s349, 64
          %s351 = scalar_lea.vmem [#allocation8], %s350
          %353 = vsyncadd %s348, 0
          %s354 = smul.addr %s28, 8
          %s355 = scalar_lea.hbm %s3, %s354
          %s356 = sshll.u32 %s355, 4
          %s357 = int_to_ptr.hbm [resolvable:$true] %s356
          %s358 = sshll.u32 %s351, 4
          %s359 = int_to_ptr.vmem [resolvable:$true] %s358
          %364 = dma.hbm_to_vmem [thread:$0]  %s357, 1024, %s359, %s348, 256, 128, 8
        $region44: #{tpu_custom_call.1} parent=31 // pred_fallthru
          _
        // Predicated region
        $region45: #{tpu_custom_call.1} parent=31 // pred_check
          %p365 = pneg %p147
        $region46: #{tpu_custom_call.1} parent=31 // pred_check_branch
          %367 = sbr.rel (%p365) target = $region48
        $region47: #{tpu_custom_call.1} parent=31 // pred_region
          %s368 = sand.u32 %s28, 1
          %s369 = scalar_lea.sflag [#allocation10], %s368
          %s370 = sand.u32 %s137, 1
          %s371 = smul.addr %s370, 64
          %s372 = scalar_lea.vmem [#allocation9], %s371
          %374 = vsyncadd %s369, 0
          %s375 = smul.addr %s28, 8
          %s376 = scalar_lea.hbm %s4, %s375
          %s377 = sshll.u32 %s376, 4
          %s378 = int_to_ptr.hbm [resolvable:$true] %s377
          %s379 = sshll.u32 %s372, 4
          %s380 = int_to_ptr.vmem [resolvable:$true] %s379
          %385 = dma.hbm_to_vmem [thread:$0]  %s378, 1024, %s380, %s369, 256, 128, 8
        $region48: #{tpu_custom_call.1} parent=31 // pred_fallthru
          _
      $region32: #{tpu_custom_call.1} parent=5 // pred_fallthru
        _
      %p386 = scmp.le.s32.totalorder 1, %s28
      %p387 = scmp.lt.s32.totalorder %s28, 3
      %p388 = pnand %p386, %p387
      %p389 = pneg %p388
      // Predicated region
      $region49: #{tpu_custom_call.1} parent=5 // pred_check
        _
      $region50: #{tpu_custom_call.1} parent=5 // pred_check_branch
        %391 = sbr.rel (%p388) target = $region52
      $region51: #{tpu_custom_call.1} parent=5 // pred_region
        %s392 = ssub.s32 %s28, 1
        %s393 = sand.u32 %s62, 1
        %s394 = scalar_lea.sflag [#allocation4], %s393
        %s395 = sand.u32 %s62, 1
        %s396 = smul.addr %s395, 64
        %s397 = scalar_lea.vmem [#allocation3], %s396
        // Predicated region
        $region53: #{tpu_custom_call.1} parent=51 // pred_check
          %p398 = pneg %p75
        $region54: #{tpu_custom_call.1} parent=51 // pred_check_branch
          %400 = sbr.rel (%p398) target = $region56
        $region55: #{tpu_custom_call.1} parent=51 // pred_region
          %402 = dma.done %s394, 1024
        $region56: #{tpu_custom_call.1} parent=51 // pred_fallthru
          _
        %s403 = sand.u32 %s33, 1
        %s404 = scalar_lea.sflag [#allocation7], %s403
        %s405 = sand.u32 %s88, 1
        %s406 = smul.addr %s405, 8
        %s407 = scalar_lea.vmem [#allocation6], %s406
        // Predicated region
        $region57: #{tpu_custom_call.1} parent=51 // pred_check
          %p408 = pneg %p101
        $region58: #{tpu_custom_call.1} parent=51 // pred_check_branch
          %410 = sbr.rel (%p408) target = $region60
        $region59: #{tpu_custom_call.1} parent=51 // pred_region
          %412 = dma.done %s404, 128
        $region60: #{tpu_custom_call.1} parent=51 // pred_fallthru
          _
        %s413 = sand.u32 %s33, 1
        %s414 = scalar_lea.sflag [#allocation7], %s413
        %s415 = sand.u32 %s114, 1
        %s416 = smul.addr %s415, 64
        %s417 = scalar_lea.vmem [#allocation8], %s416
        // Predicated region
        $region61: #{tpu_custom_call.1} parent=51 // pred_check
          %p418 = pneg %p127
        $region62: #{tpu_custom_call.1} parent=51 // pred_check_branch
          %420 = sbr.rel (%p418) target = $region64
        $region63: #{tpu_custom_call.1} parent=51 // pred_region
          %422 = dma.done %s414, 1024
        $region64: #{tpu_custom_call.1} parent=51 // pred_fallthru
          _
        %s423 = sand.u32 %s33, 1
        %s424 = scalar_lea.sflag [#allocation10], %s423
        %s425 = sand.u32 %s140, 1
        %s426 = smul.addr %s425, 64
        %s427 = scalar_lea.vmem [#allocation9], %s426
        // Predicated region
        $region65: #{tpu_custom_call.1} parent=51 // pred_check
          %p428 = pneg %p153
        $region66: #{tpu_custom_call.1} parent=51 // pred_check_branch
          %430 = sbr.rel (%p428) target = $region68
        $region67: #{tpu_custom_call.1} parent=51 // pred_region
          %432 = dma.done %s424, 1024
        $region68: #{tpu_custom_call.1} parent=51 // pred_fallthru
          _
        // Predicated region
        $region69: #{tpu_custom_call.1} parent=51 // pred_check
          %p433 = pneg %p174
        $region70: #{tpu_custom_call.1} parent=51 // pred_check_branch
          %435 = sbr.rel (%p433) target = $region72
        $region71: #{tpu_custom_call.1} parent=51 // pred_region
          %437 = dma.done [#allocation10], 512
        $region72: #{tpu_custom_call.1} parent=51 // pred_fallthru
          _
        // Predicated region
        $region73: #{tpu_custom_call.1} parent=51 // pred_check
          %p438 = pneg %p195
        $region74: #{tpu_custom_call.1} parent=51 // pred_check_branch
          %440 = sbr.rel (%p438) target = $region76
        $region75: #{tpu_custom_call.1} parent=51 // pred_region
          %442 = dma.done [#allocation13], 512
        $region76: #{tpu_custom_call.1} parent=51 // pred_fallthru
          _
        // Predicated region
        $region77: #{tpu_custom_call.1} parent=51 // pred_check
          %p443 = pneg %p216
        $region78: #{tpu_custom_call.1} parent=51 // pred_check_branch
          %445 = sbr.rel (%p443) target = $region80
        $region79: #{tpu_custom_call.1} parent=51 // pred_region
          %447 = dma.done [#allocation13], 128
        $region80: #{tpu_custom_call.1} parent=51 // pred_fallthru
          _
        %p448 = pneg %p49
        %p449 = pneg %p46
        %s450 = sand.u32 %s62, 1
        %s451 = scalar_lea.sflag [#allocation4], %s450
        %s452 = sand.u32 %s62, 1
        %s453 = smul.addr %s452, 64
        %s454 = scalar_lea.vmem [#allocation3], %s453
        %p455 = pneg %p75
        %p456 = pneg %p72
        %s457 = sand.u32 %s33, 1
        %s458 = scalar_lea.sflag [#allocation7], %s457
        %s459 = sand.u32 %s88, 1
        %s460 = smul.addr %s459, 8
        %s461 = scalar_lea.vmem [#allocation6], %s460
        %p462 = pneg %p101
        %p463 = pneg %p98
        %s464 = sand.u32 %s33, 1
        %s465 = scalar_lea.sflag [#allocation7], %s464
        %s466 = sand.u32 %s114, 1
        %s467 = smul.addr %s466, 64
        %s468 = scalar_lea.vmem [#allocation8], %s467
        %p469 = pneg %p127
        %p470 = pneg %p124
        %s471 = sand.u32 %s33, 1
        %s472 = scalar_lea.sflag [#allocation10], %s471
        %s473 = sand.u32 %s140, 1
        %s474 = smul.addr %s473, 64
        %s475 = scalar_lea.vmem [#allocation9], %s474
        %p476 = pneg %p153
        %p477 = pneg %p150
        %p478 = pneg %p174
        %p479 = pneg %p171
        %p480 = pneg %p195
        %p481 = pneg %p192
        %p482 = pneg %p216
        %p483 = pneg %p213
        %p484 = pneg %p242
        %p485 = pneg %p239
        %s486 = sand.u32 %s229, 1
        %s487 = scalar_lea.sflag [#allocation5], %s486
        %s488 = sand.u32 %s229, 1
        %s489 = smul.addr %s488, 64
        %s490 = scalar_lea.vmem [#allocation15], %s489
        %s491 = sld [smem:[#allocation2]]
        %v492 = vld [vmem:[%s397] sm:$0xff]
        %v493 = vld [vmem:[%s397 + $0x8] sm:$0xff]
        %v494 = vld [vmem:[%s397 + $0x10] sm:$0xff]
        %v495 = vld [vmem:[%s397 + $0x18] sm:$0xff]
        %v496 = vld [vmem:[%s397 + $0x20] sm:$0xff]
        %v497 = vld [vmem:[%s397 + $0x28] sm:$0xff]
        %v498 = vld [vmem:[%s397 + $0x30] sm:$0xff]
        %v499 = vld [vmem:[%s397 + $0x38] sm:$0xff]
        %v500 = vld [vmem:[#allocation11] sm:$0xff]
        %v501 = vld [vmem:[#allocation11 + $0x8] sm:$0xff]
        %v502 = vld [vmem:[#allocation11 + $0x10] sm:$0xff]
        %v503 = vld [vmem:[#allocation11 + $0x18] sm:$0xff]
        %vm504 = vcmask 523264
        %v506 = vsel %vm504, %v500, 0
        %v509 = vsel %vm504, %v501, 0
        %v512 = vsel %vm504, %v502, 0
        %v515 = vsel %vm504, %v503, 0
        %517 = vmatpush.msra.mxu0 0.0
        %518 = vmatpush.msra.mxu0 0.0
        %519 = vmatpush.msra.mxu0 0.0
        %520 = vmatpush.msra.mxu0 0.0
        %521 = vmatpush.msra.mxu0 0.0
        %522 = vmatpush.msra.mxu0 0.0
        %523 = vmatpush.msra.mxu0 0.0
        %524 = vmatpush.msra.mxu0 0.0
        %525 = vmatpush.msra.mxu0 %v499
        %526 = vmatpush.msra.mxu0 %v498
        %527 = vmatpush.msra.mxu0 %v497
        %528 = vmatpush.msra.mxu0 %v496
        %529 = vmatpush.msra.mxu0 %v495
        %530 = vmatpush.msra.mxu0 %v494
        %531 = vmatpush.msra.mxu0 %v493
        %532 = vmatpush.msra.mxu0 %v492
        %533 = vmatmul.f32.gmra.mxu0 %v506
        %v534 = vpop.f32.mrf.mxu0
        %v535 = vadd.f32 0.0, %v534
        %536 = vmatmul.f32.gmra.mxu0 %v509
        %v537 = vpop.f32.mrf.mxu0
        %v538 = vadd.f32 0.0, %v537
        %539 = vmatmul.f32.gmra.mxu0 %v512
        %v540 = vpop.f32.mrf.mxu0
        %v541 = vadd.f32 0.0, %v540
        %542 = vmatmul.f32.gmra.mxu0 %v515
        %v543 = vpop.f32.mrf.mxu0
        %v544 = vadd.f32 0.0, %v543
        %545 = vdwg.mxu0
        %v546 = vand.u32 2147483647, %v535
        %v547 = vand.u32 2147483647, %v538
        %v548 = vand.u32 2147483647, %v541
        %v549 = vand.u32 2147483647, %v544
        %v550 = vstv %s491
        %v551 = vadd.f32 %v546, %v550
        %v552 = vadd.f32 %v547, %v550
        %v553 = vadd.f32 %v548, %v550
        %v554 = vadd.f32 %v549, %v550
        %v555 = vmax.f32 %v551, 0.0
        %v556 = vmax.f32 %v552, 0.0
        %v557 = vmax.f32 %v553, 0.0
        %v558 = vmax.f32 %v554, 0.0
        %v559 = vrcp.pop %v546
        %v560 = vrcp.pop %v547
        %v561 = vrcp.pop %v548
        %v562 = vrcp.pop %v549
        %v563 = vmul.f32 %v555, %v559
        %v564 = vmul.f32 %v556, %v560
        %v565 = vmul.f32 %v557, %v561
        %v566 = vmul.f32 %v558, %v562
        %vm567 = vcmp.gt.f32.partialorder %v546, 0.0
        %vm568 = vcmp.gt.f32.partialorder %v547, 0.0
        %vm569 = vcmp.gt.f32.partialorder %v548, 0.0
        %vm570 = vcmp.gt.f32.partialorder %v549, 0.0
        %v571 = vmul.f32 %v563, %v535
        %v572 = vmul.f32 %v564, %v538
        %v573 = vmul.f32 %v565, %v541
        %v574 = vmul.f32 %v566, %v544
        %v575 = vsel %vm567, %v571, 0.0
        %v576 = vsel %vm568, %v572, 0.0
        %v577 = vsel %vm569, %v573, 0.0
        %v578 = vsel %vm570, %v574, 0.0
        %v579 = vld [vmem:[#allocation12] sm:$0xff]
        %v580 = vld [vmem:[#allocation12 + $0x8] sm:$0xff]
        %v581 = vld [vmem:[#allocation12 + $0x10] sm:$0xff]
        %v582 = vld [vmem:[#allocation12 + $0x18] sm:$0xff]
        %vm583 = vcmask 261120
        %v585 = vsel %vm583, %v579, 0
        %v588 = vsel %vm583, %v580, 0
        %v591 = vsel %vm583, %v581, 0
        %v594 = vsel %vm583, %v582, 0
        %596 = vmatpush.msra.mxu0 0.0
        %597 = vmatpush.msra.mxu0 0.0
        %598 = vmatpush.msra.mxu0 0.0
        %599 = vmatpush.msra.mxu0 0.0
        %600 = vmatpush.msra.mxu0 0.0
        %601 = vmatpush.msra.mxu0 0.0
        %602 = vmatpush.msra.mxu0 0.0
        %603 = vmatpush.msra.mxu0 0.0
        %604 = vmatpush.msra.mxu0 0.0
        %605 = vmatpush.msra.mxu0 0.0
        %606 = vmatpush.msra.mxu0 0.0
        %607 = vmatpush.msra.mxu0 0.0
        %608 = vmatpush.msra.mxu0 %v578
        %609 = vmatpush.msra.mxu0 %v577
        %610 = vmatpush.msra.mxu0 %v576
        %611 = vmatpush.msra.mxu0 %v575
        %612 = vmatmul.f32.gmra.mxu0 %v585
        %v613 = vpop.f32.mrf.mxu0
        %v614 = vadd.f32 0.0, %v613
        %615 = vmatmul.f32.gmra.mxu0 %v588
        %v616 = vpop.f32.mrf.mxu0
        %v617 = vadd.f32 0.0, %v616
        %618 = vmatmul.f32.gmra.mxu0 %v591
        %v619 = vpop.f32.mrf.mxu0
        %v620 = vadd.f32 0.0, %v619
        %621 = vmatmul.f32.gmra.mxu0 %v594
        %v622 = vpop.f32.mrf.mxu0
        %v623 = vadd.f32 0.0, %v622
        %624 = vdwg.mxu0
        %v625 = vand.u32 2147483647, %v614
        %v626 = vand.u32 2147483647, %v617
        %v627 = vand.u32 2147483647, %v620
        %v628 = vand.u32 2147483647, %v623
        %v629 = vadd.f32 %v625, %v550
        %v630 = vadd.f32 %v626, %v550
        %v631 = vadd.f32 %v627, %v550
        %v632 = vadd.f32 %v628, %v550
        %v633 = vmax.f32 %v629, 0.0
        %v634 = vmax.f32 %v630, 0.0
        %v635 = vmax.f32 %v631, 0.0
        %v636 = vmax.f32 %v632, 0.0
        %v637 = vrcp.pop %v625
        %v638 = vrcp.pop %v626
        %v639 = vrcp.pop %v627
        %v640 = vrcp.pop %v628
        %v641 = vmul.f32 %v633, %v637
        %v642 = vmul.f32 %v634, %v638
        %v643 = vmul.f32 %v635, %v639
        %v644 = vmul.f32 %v636, %v640
        %vm645 = vcmp.gt.f32.partialorder %v625, 0.0
        %vm646 = vcmp.gt.f32.partialorder %v626, 0.0
        %vm647 = vcmp.gt.f32.partialorder %v627, 0.0
        %vm648 = vcmp.gt.f32.partialorder %v628, 0.0
        %v649 = vmul.f32 %v641, %v614
        %v650 = vmul.f32 %v642, %v617
        %v651 = vmul.f32 %v643, %v620
        %v652 = vmul.f32 %v644, %v623
        %v653 = vsel %vm645, %v649, 0.0
        %v654 = vsel %vm646, %v650, 0.0
        %v655 = vsel %vm647, %v651, 0.0
        %v656 = vsel %vm648, %v652, 0.0
        %v657 = vld [vmem:[#allocation14] sm:$0xff]
        %v659 = vsel %vm583, %v657, 0
        %661 = vmatpush.msra.mxu0 0.0
        %662 = vmatpush.msra.mxu0 0.0
        %663 = vmatpush.msra.mxu0 0.0
        %664 = vmatpush.msra.mxu0 0.0
        %665 = vmatpush.msra.mxu0 0.0
        %666 = vmatpush.msra.mxu0 0.0
        %667 = vmatpush.msra.mxu0 0.0
        %668 = vmatpush.msra.mxu0 0.0
        %669 = vmatpush.msra.mxu0 0.0
        %670 = vmatpush.msra.mxu0 0.0
        %671 = vmatpush.msra.mxu0 0.0
        %672 = vmatpush.msra.mxu0 0.0
        %673 = vmatpush.msra.mxu0 %v656
        %674 = vmatpush.msra.mxu0 %v655
        %675 = vmatpush.msra.mxu0 %v654
        %676 = vmatpush.msra.mxu0 %v653
        %677 = vmatmul.f32.gmra.mxu0 %v659
        %v678 = vpop.f32.mrf.mxu0
        %v679 = vadd.f32 0.0, %v678
        %680 = vdwg.mxu0
        %v681 = vand.u32 2147483647, %v679
        %v682 = vxor.u32 %v681, 2147483648
        %v683 = vmul.f32 %v682, 1.442695
        %v684 = vpow.pop %v683
        %v685 = vadd.f32 %v684, 1.0
        %v686 = vrcp.pop %v685
        %v687 = vmul.f32 %v685, %v686
        %v688 = vsub.f32 1.0, %v687
        %v689 = vmul.f32 %v686, %v688
        %v690 = vadd.f32 %v686, %v689
        %vm691 = vweird.f32 %v685
        %vm692 = vweird.f32 %v686
        %vm693 = vmor %vm691, %vm692
        %v694 = vsel %vm693, %v686, %v690
        %v695 = vand.u32 2147483647, %v685
        %vm696 = vcmp.eq.f32.partialorder %v695, 8.507059e+37
        %v697 = vand.u32 %v685, 2147483648
        %v698 = vor.u32 1.1754944e-38, %v697
        %v699 = vsel %vm696, %v698, %v694
        %v700 = vmul.f32 1.0, %v699
        %v701 = vld [vmem:[%s407] sm:$0xff]
        %v702 = vmul.f32 %v700, %v701
        %v703 = vld [vmem:[%s417] sm:$0xff]
        %v704 = vld [vmem:[%s417 + $0x8] sm:$0xff]
        %v705 = vld [vmem:[%s417 + $0x10] sm:$0xff]
        %v706 = vld [vmem:[%s417 + $0x18] sm:$0xff]
        %v707 = vld [vmem:[%s417 + $0x20] sm:$0xff]
        %v708 = vld [vmem:[%s417 + $0x28] sm:$0xff]
        %v709 = vld [vmem:[%s417 + $0x30] sm:$0xff]
        %v710 = vld [vmem:[%s417 + $0x38] sm:$0xff]
        %v711 = vmul.f32 %v703, %v702
        %v712 = vmul.f32 %v704, %v702
        %v713 = vmul.f32 %v705, %v702
        %v714 = vmul.f32 %v706, %v702
        %v715 = vmul.f32 %v707, %v702
        %v716 = vmul.f32 %v708, %v702
        %v717 = vmul.f32 %v709, %v702
        %v718 = vmul.f32 %v710, %v702
        %v719 = vld [vmem:[%s427] sm:$0xff]
        %v720 = vld [vmem:[%s427 + $0x8] sm:$0xff]
        %v721 = vld [vmem:[%s427 + $0x10] sm:$0xff]
        %v722 = vld [vmem:[%s427 + $0x18] sm:$0xff]
        %v723 = vld [vmem:[%s427 + $0x20] sm:$0xff]
        %v724 = vld [vmem:[%s427 + $0x28] sm:$0xff]
        %v725 = vld [vmem:[%s427 + $0x30] sm:$0xff]
        %v726 = vld [vmem:[%s427 + $0x38] sm:$0xff]
        %v727 = vperm.slane %v711, 0
        %v728 = vperm.slane %v712, 0
        %v729 = vperm.slane %v713, 0
        %v730 = vperm.slane %v714, 0
        %v731 = vperm.slane %v715, 0
        %v732 = vperm.slane %v716, 0
        %v733 = vperm.slane %v717, 0
        %v734 = vperm.slane %v718, 0
        %v735 = vmul.f32 %v727, %v719
        %v736 = vmul.f32 %v728, %v719
        %v737 = vmul.f32 %v729, %v719
        %v738 = vmul.f32 %v730, %v719
        %v739 = vmul.f32 %v731, %v719
        %v740 = vmul.f32 %v732, %v719
        %v741 = vmul.f32 %v733, %v719
        %v742 = vmul.f32 %v734, %v719
        %v743 = vperm.slane %v711, 1
        %v744 = vperm.slane %v712, 1
        %v745 = vperm.slane %v713, 1
        %v746 = vperm.slane %v714, 1
        %v747 = vperm.slane %v715, 1
        %v748 = vperm.slane %v716, 1
        %v749 = vperm.slane %v717, 1
        %v750 = vperm.slane %v718, 1
        %v751 = vmul.f32 %v743, %v720
        %v752 = vmul.f32 %v744, %v720
        %v753 = vmul.f32 %v745, %v720
        %v754 = vmul.f32 %v746, %v720
        %v755 = vmul.f32 %v747, %v720
        %v756 = vmul.f32 %v748, %v720
        %v757 = vmul.f32 %v749, %v720
        %v758 = vmul.f32 %v750, %v720
        %v759 = vadd.f32 %v735, %v751
        %v760 = vadd.f32 %v736, %v752
        %v761 = vadd.f32 %v737, %v753
        %v762 = vadd.f32 %v738, %v754
        %v763 = vadd.f32 %v739, %v755
        %v764 = vadd.f32 %v740, %v756
        %v765 = vadd.f32 %v741, %v757
        %v766 = vadd.f32 %v742, %v758
        %v767 = vperm.slane %v711, 2
        %v768 = vperm.slane %v712, 2
        %v769 = vperm.slane %v713, 2
        %v770 = vperm.slane %v714, 2
        %v771 = vperm.slane %v715, 2
        %v772 = vperm.slane %v716, 2
        %v773 = vperm.slane %v717, 2
        %v774 = vperm.slane %v718, 2
        %v775 = vmul.f32 %v767, %v721
        %v776 = vmul.f32 %v768, %v721
        %v777 = vmul.f32 %v769, %v721
        %v778 = vmul.f32 %v770, %v721
        %v779 = vmul.f32 %v771, %v721
        %v780 = vmul.f32 %v772, %v721
        %v781 = vmul.f32 %v773, %v721
        %v782 = vmul.f32 %v774, %v721
        %v783 = vadd.f32 %v759, %v775
        %v784 = vadd.f32 %v760, %v776
        %v785 = vadd.f32 %v761, %v777
        %v786 = vadd.f32 %v762, %v778
        %v787 = vadd.f32 %v763, %v779
        %v788 = vadd.f32 %v764, %v780
        %v789 = vadd.f32 %v765, %v781
        %v790 = vadd.f32 %v766, %v782
        %v791 = vperm.slane %v711, 3
        %v792 = vperm.slane %v712, 3
        %v793 = vperm.slane %v713, 3
        %v794 = vperm.slane %v714, 3
        %v795 = vperm.slane %v715, 3
        %v796 = vperm.slane %v716, 3
        %v797 = vperm.slane %v717, 3
        %v798 = vperm.slane %v718, 3
        %v799 = vmul.f32 %v791, %v722
        %v800 = vmul.f32 %v792, %v722
        %v801 = vmul.f32 %v793, %v722
        %v802 = vmul.f32 %v794, %v722
        %v803 = vmul.f32 %v795, %v722
        %v804 = vmul.f32 %v796, %v722
        %v805 = vmul.f32 %v797, %v722
        %v806 = vmul.f32 %v798, %v722
        %v807 = vadd.f32 %v783, %v799
        %v808 = vadd.f32 %v784, %v800
        %v809 = vadd.f32 %v785, %v801
        %v810 = vadd.f32 %v786, %v802
        %v811 = vadd.f32 %v787, %v803
        %v812 = vadd.f32 %v788, %v804
        %v813 = vadd.f32 %v789, %v805
        %v814 = vadd.f32 %v790, %v806
        %v815 = vperm.slane %v711, 4
        %v816 = vperm.slane %v712, 4
        %v817 = vperm.slane %v713, 4
        %v818 = vperm.slane %v714, 4
        %v819 = vperm.slane %v715, 4
        %v820 = vperm.slane %v716, 4
        %v821 = vperm.slane %v717, 4
        %v822 = vperm.slane %v718, 4
        %v823 = vmul.f32 %v815, %v723
        %v824 = vmul.f32 %v816, %v723
        %v825 = vmul.f32 %v817, %v723
        %v826 = vmul.f32 %v818, %v723
        %v827 = vmul.f32 %v819, %v723
        %v828 = vmul.f32 %v820, %v723
        %v829 = vmul.f32 %v821, %v723
        %v830 = vmul.f32 %v822, %v723
        %v831 = vadd.f32 %v807, %v823
        %v832 = vadd.f32 %v808, %v824
        %v833 = vadd.f32 %v809, %v825
        %v834 = vadd.f32 %v810, %v826
        %v835 = vadd.f32 %v811, %v827
        %v836 = vadd.f32 %v812, %v828
        %v837 = vadd.f32 %v813, %v829
        %v838 = vadd.f32 %v814, %v830
        %v839 = vperm.slane %v711, 5
        %v840 = vperm.slane %v712, 5
        %v841 = vperm.slane %v713, 5
        %v842 = vperm.slane %v714, 5
        %v843 = vperm.slane %v715, 5
        %v844 = vperm.slane %v716, 5
        %v845 = vperm.slane %v717, 5
        %v846 = vperm.slane %v718, 5
        %v847 = vmul.f32 %v839, %v724
        %v848 = vmul.f32 %v840, %v724
        %v849 = vmul.f32 %v841, %v724
        %v850 = vmul.f32 %v842, %v724
        %v851 = vmul.f32 %v843, %v724
        %v852 = vmul.f32 %v844, %v724
        %v853 = vmul.f32 %v845, %v724
        %v854 = vmul.f32 %v846, %v724
        %v855 = vadd.f32 %v831, %v847
        %v856 = vadd.f32 %v832, %v848
        %v857 = vadd.f32 %v833, %v849
        %v858 = vadd.f32 %v834, %v850
        %v859 = vadd.f32 %v835, %v851
        %v860 = vadd.f32 %v836, %v852
        %v861 = vadd.f32 %v837, %v853
        %v862 = vadd.f32 %v838, %v854
        %v863 = vperm.slane %v711, 6
        %v864 = vperm.slane %v712, 6
        %v865 = vperm.slane %v713, 6
        %v866 = vperm.slane %v714, 6
        %v867 = vperm.slane %v715, 6
        %v868 = vperm.slane %v716, 6
        %v869 = vperm.slane %v717, 6
        %v870 = vperm.slane %v718, 6
        %v871 = vmul.f32 %v863, %v725
        %v872 = vmul.f32 %v864, %v725
        %v873 = vmul.f32 %v865, %v725
        %v874 = vmul.f32 %v866, %v725
        %v875 = vmul.f32 %v867, %v725
        %v876 = vmul.f32 %v868, %v725
        %v877 = vmul.f32 %v869, %v725
        %v878 = vmul.f32 %v870, %v725
        %v879 = vadd.f32 %v855, %v871
        %v880 = vadd.f32 %v856, %v872
        %v881 = vadd.f32 %v857, %v873
        %v882 = vadd.f32 %v858, %v874
        %v883 = vadd.f32 %v859, %v875
        %v884 = vadd.f32 %v860, %v876
        %v885 = vadd.f32 %v861, %v877
        %v886 = vadd.f32 %v862, %v878
        %v887 = vperm.slane %v711, 7
        %v888 = vperm.slane %v712, 7
        %v889 = vperm.slane %v713, 7
        %v890 = vperm.slane %v714, 7
        %v891 = vperm.slane %v715, 7
        %v892 = vperm.slane %v716, 7
        %v893 = vperm.slane %v717, 7
        %v894 = vperm.slane %v718, 7
        %v895 = vmul.f32 %v887, %v726
        %v896 = vmul.f32 %v888, %v726
        %v897 = vmul.f32 %v889, %v726
        %v898 = vmul.f32 %v890, %v726
        %v899 = vmul.f32 %v891, %v726
        %v900 = vmul.f32 %v892, %v726
        %v901 = vmul.f32 %v893, %v726
        %v902 = vmul.f32 %v894, %v726
        %v903 = vadd.f32 %v879, %v895
        %v904 = vadd.f32 %v880, %v896
        %v905 = vadd.f32 %v881, %v897
        %v906 = vadd.f32 %v882, %v898
        %v907 = vadd.f32 %v883, %v899
        %v908 = vadd.f32 %v884, %v900
        %v909 = vadd.f32 %v885, %v901
        %v910 = vadd.f32 %v886, %v902
        %911 = vst [vmem:[%s490] sm:$0xff] %v903
        %912 = vst [vmem:[%s490 + $0x8] sm:$0xff] %v904
        %913 = vst [vmem:[%s490 + $0x10] sm:$0xff] %v905
        %914 = vst [vmem:[%s490 + $0x18] sm:$0xff] %v906
        %915 = vst [vmem:[%s490 + $0x20] sm:$0xff] %v907
        %916 = vst [vmem:[%s490 + $0x28] sm:$0xff] %v908
        %917 = vst [vmem:[%s490 + $0x30] sm:$0xff] %v909
        %918 = vst [vmem:[%s490 + $0x38] sm:$0xff] %v910
        %s919 = sand.u32 %s229, 1
        %s920 = scalar_lea.sflag [#allocation5], %s919
        %s921 = sand.u32 %s229, 1
        %s922 = smul.addr %s921, 64
        %s923 = scalar_lea.vmem [#allocation15], %s922
        // Predicated region
        $region81: #{tpu_custom_call.1} parent=51 // pred_check
          %p924 = pneg %p239
        $region82: #{tpu_custom_call.1} parent=51 // pred_check_branch
          %926 = sbr.rel (%p924) target = $region84
        $region83: #{tpu_custom_call.1} parent=51 // pred_region
          %928 = vsyncadd %s920, 0
          %s929 = smul.addr %s33, 8
          %s930 = scalar_lea.hbm %s8, %s929
          %s931 = sshll.u32 %s923, 4
          %s932 = int_to_ptr.vmem [resolvable:$true] %s931
          %s933 = sshll.u32 %s930, 4
          %s934 = int_to_ptr.hbm [resolvable:$true] %s933
          %939 = dma.vmem_to_hbm [thread:$0]  %s932, 1024, %s934, %s920, 128, 256, 8
        $region84: #{tpu_custom_call.1} parent=51 // pred_fallthru
          _
      $region52: #{tpu_custom_call.1} parent=5 // pred_fallthru
        _
      %p940 = scmp.le.s32.totalorder 2, %s28
      // Predicated region
      $region85: #{tpu_custom_call.1} parent=5 // pred_check
        %p941 = pneg %p940
      $region86: #{tpu_custom_call.1} parent=5 // pred_check_branch
        %943 = sbr.rel (%p941) target = $region88
      $region87: #{tpu_custom_call.1} parent=5 // pred_region
        %s944 = ssub.s32 %s28, 2
        // Predicated region
        $region89: #{tpu_custom_call.1} parent=87 // pred_check
          %p945 = pneg %p245
        $region90: #{tpu_custom_call.1} parent=87 // pred_check_branch
          %947 = sbr.rel (%p945) target = $region92
        $region91: #{tpu_custom_call.1} parent=87 // pred_region
          %s948 = sand.u32 %s230, 1
          %s949 = scalar_lea.sflag [#allocation5], %s948
          %s950 = sand.u32 %s230, 1
          %s951 = smul.addr %s950, 64
          %s952 = scalar_lea.vmem [#allocation15], %s951
          %954 = dma.done %s949, 1024
        $region92: #{tpu_custom_call.1} parent=87 // pred_fallthru
          _
      $region88: #{tpu_custom_call.1} parent=5 // pred_fallthru
        _
    $region6: #{tpu_custom_call.1} parent=1 // loop_footer
      %s32 = sadd.s32 1, %s28
    $region7: #{tpu_custom_call.1} parent=1 // loop_footer_branch
      %27 = sbr.rel target = $region3
    $region8: #{tpu_custom_call.1} parent=1 // loop_exit
      _
    %955 = vsyncpa [#allocation4], 1
    %s956 = scalar_lea.sflag [#allocation4], 1
    %957 = vsyncpa %s956, 1
    %958 = vsyncpa [#allocation7], 1
    %s959 = scalar_lea.sflag [#allocation7], 1
    %960 = vsyncpa %s959, 1
    %961 = vsyncpa [#allocation10], 1
    %s962 = scalar_lea.sflag [#allocation10], 1
    %963 = vsyncpa %s962, 1
    %964 = vsyncpa [#allocation13], 1
    %965 = vsyncpa [#allocation5], 1
    %s966 = scalar_lea.sflag [#allocation5], 1
    %967 = vsyncpa %s966, 1

</llo_original>
